<compile_context>
chip_gen: v5e
topology: v5e:2x2
jax: 0.10.0
libtpu: 0.0.40
codegen_flags: <defaults>
</compile_context>

<pallas_src>
import functools

import jax
import jax.numpy as jnp
import numpy as np
from jax import lax
from jax.experimental import pallas as pl
from jax.experimental.pallas import tpu as pltpu


def _basic_block_kernel(x_ref, lm_ref, vm_ref, rm_ref,
                        w1_ref, g1_ref, b1_ref,
                        w2_ref, g2_ref, b2_ref,
                        o_ref, *, Lp, inv_n, eps, mxu_dtype, shift_dtype):
    # Precomputed column masks (wrapper-side; no in-kernel modulo):
    #   lm: l-1 neighbour exists inside the same sample AND the column is real
    #   vm: the column is a real (batch, length) position (not lane padding)
    #   rm: l+1 neighbour exists inside the same sample AND the column is real
    lm = lm_ref[...]
    vm = vm_ref[...]
    rm = rm_ref[...]

    def conv3(y, w_ref):
        # y: (Cin, Lp) in shift_dtype with exactly-zero padding columns.
        # 3-tap conv as THREE accumulating MXU dots (no (3*Cin, Lp) im2col concat).
        # The +-1 shifts are circular lane rotations (XLU slot) + boundary masks;
        # the masks also keep every lane-padding column exactly zero.
        y_m1 = pltpu.roll(y, shift=1, axis=1) * lm          # value at l-1
        y_p1 = pltpu.roll(y, shift=Lp - 1, axis=1) * rm     # value at l+1 (circular -1)
        acc = jnp.dot(w_ref[1], y.astype(mxu_dtype),
                      preferred_element_type=jnp.float32)
        acc = acc + jnp.dot(w_ref[0], y_m1.astype(mxu_dtype),
                            preferred_element_type=jnp.float32)
        acc = acc + jnp.dot(w_ref[2], y_p1.astype(mxu_dtype),
                            preferred_element_type=jnp.float32)
        return acc                                          # (Cout, Lp) f32

    def bn_relu(y, gamma, beta, relu):
        # One-pass biased batch stats over the N*L valid columns (padding columns
        # of y are exactly zero, so unmasked sums are exact), folded into a single
        # per-channel scale/bias FMA. rsqrt goes to the EUP.
        s1 = jnp.sum(y, axis=1, keepdims=True)
        s2 = jnp.sum(y * y, axis=1, keepdims=True)
        mean = s1 * inv_n
        var = s2 * inv_n - mean * mean
        scale = gamma * lax.rsqrt(var + eps)
        bias = beta - mean * scale
        out = y * scale + bias
        return jnp.maximum(out, 0.0) if relu else out

    # conv1 -> bn1 -> relu   (cast-early: rolls/masks run in shift_dtype)
    h = conv3(x_ref[...].astype(shift_dtype), w1_ref)
    h = bn_relu(h, g1_ref[...], b1_ref[...], relu=True)
    # conv2 -> bn2 ; re-zero lane-padding columns first (bn1's bias made them
    # nonzero) so conv2's output padding stays zero and bn2 stats stay exact.
    h = h.astype(shift_dtype) * vm
    y2 = bn_relu(conv3(h, w2_ref), g2_ref[...], b2_ref[...], relu=False)
    # Residual add (identity) + relu. Re-read x_ref here instead of holding the
    # conv1 input live across both convs (shorter vreg live ranges).
    o_ref[...] = jnp.maximum(y2 + x_ref[...], 0.0)


def basic_block1d_cnl(x2, w1, g1, b1, w2, g2, b2, *, N, L,
                      eps=1e-5, mxu_dtype=jnp.bfloat16, cast_early=True):
    """Fused BasicBlock1d on lane-dense (C, Lp) activations.

    x2 : (C, Lp) f32 — the NCL activation flattened as (C, N*L), zero-padded on the
         lane axis to Lp (multiple of 128). Output has the same layout, so a chain
         of blocks can stay in this layout and relayout only once per model.
    w* : (planes, Cin, 3) conv weights.  g*/b*: (planes,) BN affine params.
    mxu_dtype  : matmul operand dtype (bf16 = 2x MXU throughput; f32 accumulation).
    cast_early : cast activations to mxu_dtype BEFORE the rolls/masks (best on
                 v6e/v7x which have a bf16 VPU); set False on v5e to keep the
                 elementwise shift work in f32.
    """
    C, Lp = x2.shape
    planes = w1.shape[0]
    NL = N * L
    assert Lp % 128 == 0 and NL <= Lp
    assert w1.shape == (planes, C, 3) and w2.shape == (planes, planes, 3)
    assert planes == C, "identity residual requires inplanes == planes (stride=1, downsample=None)"

    shift_dtype = mxu_dtype if cast_early else jnp.float32

    # Precomputed column masks (avoids per-iteration integer modulo on the VPU).
    col = np.arange(Lp)
    pos = col % L
    valid = col < NL
    lm = jnp.asarray((valid & (pos != 0)).reshape(1, Lp), dtype=shift_dtype)
    vm = jnp.asarray(valid.reshape(1, Lp), dtype=shift_dtype)
    rm = jnp.asarray((valid & (pos != L - 1)).reshape(1, Lp), dtype=shift_dtype)

    # Per-tap weight matrices, stacked as (3, Cout, Cin): tap 0 -> l-1, 1 -> l, 2 -> l+1.
    w1s = jnp.transpose(w1, (2, 0, 1)).astype(mxu_dtype)
    w2s = jnp.transpose(w2, (2, 0, 1)).astype(mxu_dtype)

    # Per-channel BN affine params as (planes, 1) for lane-broadcast in-kernel.
    g1r = g1.reshape(planes, 1).astype(jnp.float32)
    b1r = b1.reshape(planes, 1).astype(jnp.float32)
    g2r = g2.reshape(planes, 1).astype(jnp.float32)
    b2r = b2.reshape(planes, 1).astype(jnp.float32)

    kernel = functools.partial(_basic_block_kernel, Lp=Lp, inv_n=1.0 / float(NL),
                               eps=float(eps), mxu_dtype=mxu_dtype,
                               shift_dtype=shift_dtype)

    w_itemsize = jnp.dtype(mxu_dtype).itemsize
    cost = pl.CostEstimate(
        flops=int(2 * (2 * planes * 3 * C * NL)),            # two 3-tap convs on the MXU
        transcendentals=int(2 * planes),                     # one rsqrt per channel per BN
        bytes_accessed=int(4 * C * Lp + 4 * planes * Lp      # activation in / out
                           + (w1s.size + w2s.size) * w_itemsize
                           + 3 * Lp * jnp.dtype(shift_dtype).itemsize
                           + 4 * 4 * planes),
    )

    vmem = pl.BlockSpec(memory_space=pltpu.MemorySpace.VMEM)
    return pl.pallas_call(
        kernel,
        out_shape=jax.ShapeDtypeStruct((planes, Lp), jnp.float32),
        in_specs=[vmem] * 10,
        out_specs=vmem,
        # Single-shot, fully VMEM-resident: 48 MiB fits v7x's 64 MiB/TC with
        # headroom and lifts v5e's 16 MiB scoped default.
        compiler_params=pltpu.CompilerParams(vmem_limit_bytes=48 * 1024 * 1024),
        cost_estimate=cost,
    )(x2, lm, vm, rm, w1s, g1r, b1r, w2s, g2r, b2r)


def basic_block1d(x, w1, g1, b1, w2, g2, b2, *, eps=1e-5,
                  mxu_dtype=jnp.bfloat16, cast_early=True):
    """NCL-layout convenience wrapper.

    For a chain of blocks prefer calling `basic_block1d_cnl` directly so the
    NCL <-> (C, N*L) relayout happens once per model, not once per block.
    """
    N, C, L = x.shape
    NL = N * L
    Lp = max(128, pl.cdiv(NL, 128) * 128)   # lane-dense, 128-aligned free dimension

    x2 = jnp.transpose(x.astype(jnp.float32), (1, 0, 2)).reshape(C, NL)
    x2 = jnp.pad(x2, ((0, 0), (0, Lp - NL)))

    out2 = basic_block1d_cnl(x2, w1, g1, b1, w2, g2, b2, N=N, L=L, eps=eps,
                             mxu_dtype=mxu_dtype, cast_early=cast_early)

    return jnp.transpose(out2[:, :NL].reshape(C, N, L), (1, 0, 2))


def _reference(x, w1, g1, b1, w2, g2, b2, eps=1e-5):
    """Pure-JAX reference mirroring the PyTorch forward (training-mode BN)."""
    def conv(z, w):
        return lax.conv_general_dilated(
            z, w, window_strides=(1,), padding=((1, 1),),
            dimension_numbers=('NCH', 'OIH', 'NCH'))

    def bn(y, g, b):
        m = jnp.mean(y, axis=(0, 2), keepdims=True)
        v = jnp.mean(jnp.square(y - m), axis=(0, 2), keepdims=True)
        return (y - m) / jnp.sqrt(v + eps) * g.reshape(1, -1, 1) + b.reshape(1, -1, 1)

    h = jax.nn.relu(bn(conv(x, w1), g1, b1))
    h = bn(conv(h, w2), g2, b2) + x
    return jax.nn.relu(h)


if __name__ == "__main__":
    # Small, deterministic example: N=2, inplanes=planes=8, L=16.
    N, C, L = 2, 8, 16
    planes = C

    key = jax.random.PRNGKey(0)
    kx, k1, k2 = jax.random.split(key, 3)

    x = jax.random.normal(kx, (N, C, L), dtype=jnp.float32)
    w1 = jax.random.normal(k1, (planes, C, 3), dtype=jnp.float32) * 0.2
    w2 = jax.random.normal(k2, (planes, planes, 3), dtype=jnp.float32) * 0.2
    g1 = jnp.ones((planes,), jnp.float32)
    b1 = jnp.zeros((planes,), jnp.float32)
    g2 = jnp.ones((planes,), jnp.float32)
    b2 = jnp.zeros((planes,), jnp.float32)

    ref = jax.block_until_ready(_reference(x, w1, g1, b1, w2, g2, b2))

    # f32 MXU operands: matches the f32 reference tightly.
    out_f32 = jax.block_until_ready(
        basic_block1d(x, w1, g1, b1, w2, g2, b2, mxu_dtype=jnp.float32))
    np.testing.assert_allclose(np.asarray(out_f32), np.asarray(ref), rtol=2e-3, atol=2e-3)

    # bf16 MXU operands with f32 accumulation (the fast path): looser tolerance
    # because conv inputs/weights are rounded to bf16.
    out_bf16 = jax.block_until_ready(
        basic_block1d(x, w1, g1, b1, w2, g2, b2, mxu_dtype=jnp.bfloat16))
    np.testing.assert_allclose(np.asarray(out_bf16), np.asarray(ref), rtol=5e-2, atol=5e-2)

    print("KERNEL_OK")
</pallas_src>

<mosaic_0001>
module attributes {stable_mosaic.version = 11 : i64} {
  func.func @_basic_block_kernel(%arg0: memref<8x128xf32, #tpu.memory_space<vmem>>, %arg1: memref<1x128xf32, #tpu.memory_space<vmem>>, %arg2: memref<1x128xf32, #tpu.memory_space<vmem>>, %arg3: memref<1x128xf32, #tpu.memory_space<vmem>>, %arg4: memref<3x8x8xf32, #tpu.memory_space<vmem>>, %arg5: memref<8x1xf32, #tpu.memory_space<vmem>>, %arg6: memref<8x1xf32, #tpu.memory_space<vmem>>, %arg7: memref<3x8x8xf32, #tpu.memory_space<vmem>>, %arg8: memref<8x1xf32, #tpu.memory_space<vmem>>, %arg9: memref<8x1xf32, #tpu.memory_space<vmem>>, %arg10: memref<8x128xf32, #tpu.memory_space<vmem>>) attributes {dimension_semantics = [], scalar_prefetch = 0 : i64, scratch_operands = 0 : i64, tpu.core_type = #tpu.core_type<tc>} {
    %c0 = arith.constant 0 : index
    %c0_0 = arith.constant 0 : index
    %0 = vector.load %arg1[%c0, %c0_0] : memref<1x128xf32, #tpu.memory_space<vmem>>, vector<1x128xf32>
    %c0_1 = arith.constant 0 : index
    %c0_2 = arith.constant 0 : index
    %1 = vector.load %arg2[%c0_1, %c0_2] : memref<1x128xf32, #tpu.memory_space<vmem>>, vector<1x128xf32>
    %c0_3 = arith.constant 0 : index
    %c0_4 = arith.constant 0 : index
    %2 = vector.load %arg3[%c0_3, %c0_4] : memref<1x128xf32, #tpu.memory_space<vmem>>, vector<1x128xf32>
    %c0_5 = arith.constant 0 : index
    %c0_6 = arith.constant 0 : index
    %3 = vector.load %arg0[%c0_5, %c0_6] : memref<8x128xf32, #tpu.memory_space<vmem>>, vector<8x128xf32>
    %c1_i32 = arith.constant 1 : i32
    %4 = tpu.dynamic_rotate %3 by %c1_i32 dim 1 : vector<8x128xf32>, i32 -> vector<8x128xf32>
    %5 = vector.broadcast %0 : vector<1x128xf32> to vector<8x128xf32>
    %6 = arith.mulf %4, %5 : vector<8x128xf32>
    %c127_i32 = arith.constant 127 : i32
    %7 = tpu.dynamic_rotate %3 by %c127_i32 dim 1 : vector<8x128xf32>, i32 -> vector<8x128xf32>
    %8 = vector.broadcast %2 : vector<1x128xf32> to vector<8x128xf32>
    %9 = arith.mulf %7, %8 : vector<8x128xf32>
    %c1 = arith.constant 1 : index
    %c0_7 = arith.constant 0 : index
    %c0_8 = arith.constant 0 : index
    %10 = vector.load %arg4[%c1, %c0_7, %c0_8] : memref<3x8x8xf32, #tpu.memory_space<vmem>>, vector<1x8x8xf32>
    %11 = vector.shape_cast %10 : vector<1x8x8xf32> to vector<8x8xf32>
    %cst = arith.constant dense<0.000000e+00> : vector<8x128xf32>
    %12 = tpu.matmul %11, %3, %cst {dimension_numbers = #tpu.dot_dimension_numbers<[1], [0], [0], [1], [0, 0, 1, 1], [], []>} : vector<8x8xf32>, vector<8x128xf32>, vector<8x128xf32> -> vector<8x128xf32>
    %c0_9 = arith.constant 0 : index
    %c0_10 = arith.constant 0 : index
    %c0_11 = arith.constant 0 : index
    %13 = vector.load %arg4[%c0_9, %c0_10, %c0_11] : memref<3x8x8xf32, #tpu.memory_space<vmem>>, vector<1x8x8xf32>
    %14 = vector.shape_cast %13 : vector<1x8x8xf32> to vector<8x8xf32>
    %cst_12 = arith.constant dense<0.000000e+00> : vector<8x128xf32>
    %15 = tpu.matmul %14, %6, %cst_12 {dimension_numbers = #tpu.dot_dimension_numbers<[1], [0], [0], [1], [0, 0, 1, 1], [], []>} : vector<8x8xf32>, vector<8x128xf32>, vector<8x128xf32> -> vector<8x128xf32>
    %16 = arith.addf %12, %15 : vector<8x128xf32>
    %c2 = arith.constant 2 : index
    %c0_13 = arith.constant 0 : index
    %c0_14 = arith.constant 0 : index
    %17 = vector.load %arg4[%c2, %c0_13, %c0_14] : memref<3x8x8xf32, #tpu.memory_space<vmem>>, vector<1x8x8xf32>
    %18 = vector.shape_cast %17 : vector<1x8x8xf32> to vector<8x8xf32>
    %cst_15 = arith.constant dense<0.000000e+00> : vector<8x128xf32>
    %19 = tpu.matmul %18, %9, %cst_15 {dimension_numbers = #tpu.dot_dimension_numbers<[1], [0], [0], [1], [0, 0, 1, 1], [], []>} : vector<8x8xf32>, vector<8x128xf32>, vector<8x128xf32> -> vector<8x128xf32>
    %20 = arith.addf %16, %19 : vector<8x128xf32>
    %c0_16 = arith.constant 0 : index
    %c0_17 = arith.constant 0 : index
    %21 = vector.load %arg5[%c0_16, %c0_17] : memref<8x1xf32, #tpu.memory_space<vmem>>, vector<8x1xf32>
    %c0_18 = arith.constant 0 : index
    %c0_19 = arith.constant 0 : index
    %22 = vector.load %arg6[%c0_18, %c0_19] : memref<8x1xf32, #tpu.memory_space<vmem>>, vector<8x1xf32>
    %cst_20 = arith.constant dense<0.000000e+00> : vector<8xf32>
    %23 = vector.multi_reduction <add>, %20, %cst_20 [1] : vector<8x128xf32> to vector<8xf32>
    %24 = vector.shape_cast %23 : vector<8xf32> to vector<8x1xf32>
    %25 = arith.mulf %20, %20 : vector<8x128xf32>
    %cst_21 = arith.constant dense<0.000000e+00> : vector<8xf32>
    %26 = vector.multi_reduction <add>, %25, %cst_21 [1] : vector<8x128xf32> to vector<8xf32>
    %27 = vector.shape_cast %26 : vector<8xf32> to vector<8x1xf32>
    %cst_22 = arith.constant 3.125000e-02 : f32
    %28 = vector.broadcast %cst_22 : f32 to vector<8x1xf32>
    %29 = arith.mulf %24, %28 : vector<8x1xf32>
    %cst_23 = arith.constant 3.125000e-02 : f32
    %30 = vector.broadcast %cst_23 : f32 to vector<8x1xf32>
    %31 = arith.mulf %27, %30 : vector<8x1xf32>
    %32 = arith.mulf %29, %29 : vector<8x1xf32>
    %33 = arith.subf %31, %32 : vector<8x1xf32>
    %cst_24 = arith.constant 9.99999974E-6 : f32
    %34 = vector.broadcast %cst_24 : f32 to vector<8x1xf32>
    %35 = arith.addf %33, %34 : vector<8x1xf32>
    %36 = math.rsqrt %35 : vector<8x1xf32>
    %37 = arith.mulf %21, %36 : vector<8x1xf32>
    %38 = arith.mulf %29, %37 : vector<8x1xf32>
    %39 = arith.subf %22, %38 : vector<8x1xf32>
    %40 = vector.broadcast %37 : vector<8x1xf32> to vector<8x128xf32>
    %41 = arith.mulf %20, %40 : vector<8x128xf32>
    %42 = vector.broadcast %39 : vector<8x1xf32> to vector<8x128xf32>
    %43 = arith.addf %41, %42 : vector<8x128xf32>
    %cst_25 = arith.constant 0.000000e+00 : f32
    %44 = vector.broadcast %cst_25 : f32 to vector<8x128xf32>
    %45 = arith.maximumf %43, %44 : vector<8x128xf32>
    %46 = vector.broadcast %1 : vector<1x128xf32> to vector<8x128xf32>
    %47 = arith.mulf %45, %46 : vector<8x128xf32>
    %c1_i32_26 = arith.constant 1 : i32
    %48 = tpu.dynamic_rotate %47 by %c1_i32_26 dim 1 : vector<8x128xf32>, i32 -> vector<8x128xf32>
    %49 = vector.broadcast %0 : vector<1x128xf32> to vector<8x128xf32>
    %50 = arith.mulf %48, %49 : vector<8x128xf32>
    %c127_i32_27 = arith.constant 127 : i32
    %51 = tpu.dynamic_rotate %47 by %c127_i32_27 dim 1 : vector<8x128xf32>, i32 -> vector<8x128xf32>
    %52 = vector.broadcast %2 : vector<1x128xf32> to vector<8x128xf32>
    %53 = arith.mulf %51, %52 : vector<8x128xf32>
    %c1_28 = arith.constant 1 : index
    %c0_29 = arith.constant 0 : index
    %c0_30 = arith.constant 0 : index
    %54 = vector.load %arg7[%c1_28, %c0_29, %c0_30] : memref<3x8x8xf32, #tpu.memory_space<vmem>>, vector<1x8x8xf32>
    %55 = vector.shape_cast %54 : vector<1x8x8xf32> to vector<8x8xf32>
    %cst_31 = arith.constant dense<0.000000e+00> : vector<8x128xf32>
    %56 = tpu.matmul %55, %47, %cst_31 {dimension_numbers = #tpu.dot_dimension_numbers<[1], [0], [0], [1], [0, 0, 1, 1], [], []>} : vector<8x8xf32>, vector<8x128xf32>, vector<8x128xf32> -> vector<8x128xf32>
    %c0_32 = arith.constant 0 : index
    %c0_33 = arith.constant 0 : index
    %c0_34 = arith.constant 0 : index
    %57 = vector.load %arg7[%c0_32, %c0_33, %c0_34] : memref<3x8x8xf32, #tpu.memory_space<vmem>>, vector<1x8x8xf32>
    %58 = vector.shape_cast %57 : vector<1x8x8xf32> to vector<8x8xf32>
    %cst_35 = arith.constant dense<0.000000e+00> : vector<8x128xf32>
    %59 = tpu.matmul %58, %50, %cst_35 {dimension_numbers = #tpu.dot_dimension_numbers<[1], [0], [0], [1], [0, 0, 1, 1], [], []>} : vector<8x8xf32>, vector<8x128xf32>, vector<8x128xf32> -> vector<8x128xf32>
    %60 = arith.addf %56, %59 : vector<8x128xf32>
    %c2_36 = arith.constant 2 : index
    %c0_37 = arith.constant 0 : index
    %c0_38 = arith.constant 0 : index
    %61 = vector.load %arg7[%c2_36, %c0_37, %c0_38] : memref<3x8x8xf32, #tpu.memory_space<vmem>>, vector<1x8x8xf32>
    %62 = vector.shape_cast %61 : vector<1x8x8xf32> to vector<8x8xf32>
    %cst_39 = arith.constant dense<0.000000e+00> : vector<8x128xf32>
    %63 = tpu.matmul %62, %53, %cst_39 {dimension_numbers = #tpu.dot_dimension_numbers<[1], [0], [0], [1], [0, 0, 1, 1], [], []>} : vector<8x8xf32>, vector<8x128xf32>, vector<8x128xf32> -> vector<8x128xf32>
    %64 = arith.addf %60, %63 : vector<8x128xf32>
    %c0_40 = arith.constant 0 : index
    %c0_41 = arith.constant 0 : index
    %65 = vector.load %arg8[%c0_40, %c0_41] : memref<8x1xf32, #tpu.memory_space<vmem>>, vector<8x1xf32>
    %c0_42 = arith.constant 0 : index
    %c0_43 = arith.constant 0 : index
    %66 = vector.load %arg9[%c0_42, %c0_43] : memref<8x1xf32, #tpu.memory_space<vmem>>, vector<8x1xf32>
    %cst_44 = arith.constant dense<0.000000e+00> : vector<8xf32>
    %67 = vector.multi_reduction <add>, %64, %cst_44 [1] : vector<8x128xf32> to vector<8xf32>
    %68 = vector.shape_cast %67 : vector<8xf32> to vector<8x1xf32>
    %69 = arith.mulf %64, %64 : vector<8x128xf32>
    %cst_45 = arith.constant dense<0.000000e+00> : vector<8xf32>
    %70 = vector.multi_reduction <add>, %69, %cst_45 [1] : vector<8x128xf32> to vector<8xf32>
    %71 = vector.shape_cast %70 : vector<8xf32> to vector<8x1xf32>
    %cst_46 = arith.constant 3.125000e-02 : f32
    %72 = vector.broadcast %cst_46 : f32 to vector<8x1xf32>
    %73 = arith.mulf %68, %72 : vector<8x1xf32>
    %cst_47 = arith.constant 3.125000e-02 : f32
    %74 = vector.broadcast %cst_47 : f32 to vector<8x1xf32>
    %75 = arith.mulf %71, %74 : vector<8x1xf32>
    %76 = arith.mulf %73, %73 : vector<8x1xf32>
    %77 = arith.subf %75, %76 : vector<8x1xf32>
    %cst_48 = arith.constant 9.99999974E-6 : f32
    %78 = vector.broadcast %cst_48 : f32 to vector<8x1xf32>
    %79 = arith.addf %77, %78 : vector<8x1xf32>
    %80 = math.rsqrt %79 : vector<8x1xf32>
    %81 = arith.mulf %65, %80 : vector<8x1xf32>
    %82 = arith.mulf %73, %81 : vector<8x1xf32>
    %83 = arith.subf %66, %82 : vector<8x1xf32>
    %84 = vector.broadcast %81 : vector<8x1xf32> to vector<8x128xf32>
    %85 = arith.mulf %64, %84 : vector<8x128xf32>
    %86 = vector.broadcast %83 : vector<8x1xf32> to vector<8x128xf32>
    %87 = arith.addf %85, %86 : vector<8x128xf32>
    %c0_49 = arith.constant 0 : index
    %c0_50 = arith.constant 0 : index
    %88 = vector.load %arg0[%c0_49, %c0_50] : memref<8x128xf32, #tpu.memory_space<vmem>>, vector<8x128xf32>
    %89 = arith.addf %87, %88 : vector<8x128xf32>
    %cst_51 = arith.constant 0.000000e+00 : f32
    %90 = vector.broadcast %cst_51 : f32 to vector<8x128xf32>
    %91 = arith.maximumf %89, %90 : vector<8x128xf32>
    %c0_52 = arith.constant 0 : index
    %c0_53 = arith.constant 0 : index
    %92 = vector.load %arg10[%c0_52, %c0_53] : memref<8x128xf32, #tpu.memory_space<vmem>>, vector<8x128xf32>
    tpu.vector_store %arg10[%c0_52, %c0_53], %91 {strides = array<i32>} : memref<8x128xf32, #tpu.memory_space<vmem>>, vector<8x128xf32>,
    return
  }
}

</mosaic_0001>

<llo_original>
// kernel: tpu_custom_call.1
$region0: #{tpu_custom_call.1}
  #allocation0 [shape = 'u32[]', space=smem, size = 0x4, offset = 0x4, fixed_abs, tag = 'smem constant byte address 0x4 - core index']
  #allocation1 [shape = 'u32[72,128]{1,0:T(1,128)}', space=vmem, size = 0x9000, scoped, tag = 'internal scratch']
  %s0 = inlined_call_operand.vmem [shape: f32[8,128], index: 0, kind: input, shape index: {}]
  %s1 = inlined_call_operand.vmem [shape: f32[1,128], index: 1, kind: input, shape index: {}]
  %s2 = inlined_call_operand.vmem [shape: f32[1,128], index: 2, kind: input, shape index: {}]
  %s3 = inlined_call_operand.vmem [shape: f32[1,128], index: 3, kind: input, shape index: {}]
  %s4 = inlined_call_operand.vmem [shape: f32[3,8,8], index: 4, kind: input, shape index: {}]
  %s5 = inlined_call_operand.vmem [shape: f32[8,1], index: 5, kind: input, shape index: {}]
  %s6 = inlined_call_operand.vmem [shape: f32[8,1], index: 6, kind: input, shape index: {}]
  %s7 = inlined_call_operand.hbm [shape: f32[3,8,8], index: 7, kind: input, shape index: {}]
  %s8 = inlined_call_operand.vmem [shape: f32[8,1], index: 8, kind: input, shape index: {}]
  %s9 = inlined_call_operand.vmem [shape: f32[8,1], index: 9, kind: input, shape index: {}]
  %s10 = inlined_call_operand.hbm [shape: f32[8,128], index: 10, kind: output, shape index: {}]
  %s11 = sld [smem:[#allocation0]]
  $region54: #{tpu_custom_call.1} parent=0
    _
  %s13 = ssub.s32 1, %s11
  %s14 = scalar_select 0, %s13, %s11
  $region1: #{tpu_custom_call.1} parent=0
    #allocation2 [shape = 'u8[12288]{0}', space=vmem, size = 0x3000, scoped, tag = 'input window, operand 7, single buffered']
    #allocation3 [shape = 's32[1]{0}', space=sflag, size = 0x4, scoped, tag = 'scoped memory for tpu_custom_call.1']
    #allocation4 [shape = 's32[1]{0}', space=sflag, size = 0x4, scoped, tag = 'scoped memory for tpu_custom_call.1']
    #allocation5 [shape = 'u8[4096]{0}', space=vmem, size = 0x1000, scoped, tag = 'output window, operand 0, single buffered']
    %15 = vsyncpa [#allocation3], 0
    %16 = vsyncpa [#allocation4], 0
    // Predicated region
    $region2: #{tpu_custom_call.1} parent=1 // pred_check
      _
    $region3: #{tpu_custom_call.1} parent=1 // pred_check_branch
      %18 = sbr.rel (0) target = $region5
    $region4: #{tpu_custom_call.1} parent=1 // pred_region
      _
    $region5: #{tpu_custom_call.1} parent=1 // pred_fallthru
      _
    // Predicated region
    $region6: #{tpu_custom_call.1} parent=1 // pred_check
      _
    $region7: #{tpu_custom_call.1} parent=1 // pred_check_branch
      %20 = sbr.rel (0) target = $region9
    $region8: #{tpu_custom_call.1} parent=1 // pred_region
      _
    $region9: #{tpu_custom_call.1} parent=1 // pred_fallthru
      _
    // Predicated region
    $region10: #{tpu_custom_call.1} parent=1 // pred_check
      _
    $region11: #{tpu_custom_call.1} parent=1 // pred_check_branch
      %22 = sbr.rel (0) target = $region13
    $region12: #{tpu_custom_call.1} parent=1 // pred_region
      _
    $region13: #{tpu_custom_call.1} parent=1 // pred_fallthru
      _
    // Predicated region
    $region14: #{tpu_custom_call.1} parent=1 // pred_check
      _
    $region15: #{tpu_custom_call.1} parent=1 // pred_check_branch
      %24 = sbr.rel (0) target = $region17
    $region16: #{tpu_custom_call.1} parent=1 // pred_region
      _
    $region17: #{tpu_custom_call.1} parent=1 // pred_fallthru
      _
    // Predicated region
    $region18: #{tpu_custom_call.1} parent=1 // pred_check
      _
    $region19: #{tpu_custom_call.1} parent=1 // pred_check_branch
      %26 = sbr.rel (0) target = $region21
    $region20: #{tpu_custom_call.1} parent=1 // pred_region
      _
    $region21: #{tpu_custom_call.1} parent=1 // pred_fallthru
      _
    // Predicated region
    $region22: #{tpu_custom_call.1} parent=1 // pred_check
      _
    $region23: #{tpu_custom_call.1} parent=1 // pred_check_branch
      %28 = sbr.rel (0) target = $region25
    $region24: #{tpu_custom_call.1} parent=1 // pred_region
      _
    $region25: #{tpu_custom_call.1} parent=1 // pred_fallthru
      _
    // Predicated region
    $region26: #{tpu_custom_call.1} parent=1 // pred_check
      _
    $region27: #{tpu_custom_call.1} parent=1 // pred_check_branch
      %30 = sbr.rel (0) target = $region29
    $region28: #{tpu_custom_call.1} parent=1 // pred_region
      _
    $region29: #{tpu_custom_call.1} parent=1 // pred_fallthru
      _
    // Predicated region
    $region30: #{tpu_custom_call.1} parent=1 // pred_check
      _
    $region31: #{tpu_custom_call.1} parent=1 // pred_check_branch
      %32 = sbr.rel (0) target = $region33
    $region32: #{tpu_custom_call.1} parent=1 // pred_region
      %34 = vsyncadd [#allocation3], 0
      %s35 = sshll.u32 %s7, 4
      %s36 = int_to_ptr.hbm [resolvable:$true] %s35
      %s37 = sshll.u32 [#allocation2], 4
      %s38 = int_to_ptr.vmem [resolvable:$true] %s37
      %43 = dma.hbm_to_vmem [thread:$0]  %s36, 384, %s38, [#allocation3], 128, 128, 8
    $region33: #{tpu_custom_call.1} parent=1 // pred_fallthru
      _
    // Predicated region
    $region34: #{tpu_custom_call.1} parent=1 // pred_check
      _
    $region35: #{tpu_custom_call.1} parent=1 // pred_check_branch
      %45 = sbr.rel (0) target = $region37
    $region36: #{tpu_custom_call.1} parent=1 // pred_region
      _
    $region37: #{tpu_custom_call.1} parent=1 // pred_fallthru
      _
    // Predicated region
    $region38: #{tpu_custom_call.1} parent=1 // pred_check
      _
    $region39: #{tpu_custom_call.1} parent=1 // pred_check_branch
      %47 = sbr.rel (0) target = $region41
    $region40: #{tpu_custom_call.1} parent=1 // pred_region
      _
    $region41: #{tpu_custom_call.1} parent=1 // pred_fallthru
      _
    // Predicated region
    $region42: #{tpu_custom_call.1} parent=1 // pred_check
      _
    $region43: #{tpu_custom_call.1} parent=1 // pred_check_branch
      %49 = sbr.rel (0) target = $region45
    $region44: #{tpu_custom_call.1} parent=1 // pred_region
      %51 = dma.done [#allocation3], 384
    $region45: #{tpu_custom_call.1} parent=1 // pred_fallthru
      _
    %v52 = vld [vmem:[%s1] sm:$0x1]
    %v53 = vld [vmem:[%s2] sm:$0x1]
    %v54 = vld [vmem:[%s3] sm:$0x1]
    %v55 = vld [vmem:[%s0] sm:$0xff]
    %56 = vrot.lane.b32.xlu0 %v55, 1
    %v57 = vpop.permute.xlu0 %56
    %v59 = vperm.slane %v52, 0
    %v61 = vmul.f32 %v57, %v59
    %62 = vrot.lane.b32.xlu0 %v55, 127
    %v63 = vpop.permute.xlu0 %62
    %v65 = vperm.slane %v54, 0
    %v67 = vmul.f32 %v63, %v65
    %s68 = scalar_lea.vmem %s4, 8
    %v69 = vld [vmem:[%s68] sm:$0xff]
    %v70 = vld [vmem:[%s4] sm:$0xff]
    %vm71 = vcmask 64512
    %v73 = vsel %vm71, %v70, 0
    %75 = vmatpush.msra.mxu0 0.0
    %76 = vmatpush.msra.mxu0 0.0
    %77 = vmatpush.msra.mxu0 0.0
    %78 = vmatpush.msra.mxu0 0.0
    %79 = vmatpush.msra.mxu0 0.0
    %80 = vmatpush.msra.mxu0 0.0
    %81 = vmatpush.msra.mxu0 0.0
    %82 = vmatpush.msra.mxu0 0.0
    %83 = vmatpush.msra.mxu0 0.0
    %84 = vmatpush.msra.mxu0 0.0
    %85 = vmatpush.msra.mxu0 0.0
    %86 = vmatpush.msra.mxu0 0.0
    %87 = vmatpush.msra.mxu0 0.0
    %88 = vmatpush.msra.mxu0 0.0
    %89 = vmatpush.msra.mxu0 0.0
    %90 = vmatpush.msra.mxu0 %v61
    %91 = vmatmul.f32.gmra.mxu0 %v73
    %v92 = vpop.f32.mrf.mxu0
    %v93 = vadd.f32 0.0, %v92
    %94 = vdwg.mxu0
    %v96 = vsel %vm71, %v69, 0
    %98 = vmatpush.msra.mxu0 0.0
    %99 = vmatpush.msra.mxu0 0.0
    %100 = vmatpush.msra.mxu0 0.0
    %101 = vmatpush.msra.mxu0 0.0
    %102 = vmatpush.msra.mxu0 0.0
    %103 = vmatpush.msra.mxu0 0.0
    %104 = vmatpush.msra.mxu0 0.0
    %105 = vmatpush.msra.mxu0 0.0
    %106 = vmatpush.msra.mxu0 0.0
    %107 = vmatpush.msra.mxu0 0.0
    %108 = vmatpush.msra.mxu0 0.0
    %109 = vmatpush.msra.mxu0 0.0
    %110 = vmatpush.msra.mxu0 0.0
    %111 = vmatpush.msra.mxu0 0.0
    %112 = vmatpush.msra.mxu0 0.0
    %113 = vmatpush.msra.mxu0 %v55
    %114 = vmatmul.f32.gmra.mxu0 %v96
    %v115 = vpop.f32.mrf.mxu0
    %v116 = vadd.f32 %v93, %v115
    %117 = vdwg.mxu0
    %s118 = scalar_lea.vmem %s4, 16
    %v119 = vld [vmem:[%s118] sm:$0xff]
    %v121 = vsel %vm71, %v119, 0
    %123 = vmatpush.msra.mxu0 0.0
    %124 = vmatpush.msra.mxu0 0.0
    %125 = vmatpush.msra.mxu0 0.0
    %126 = vmatpush.msra.mxu0 0.0
    %127 = vmatpush.msra.mxu0 0.0
    %128 = vmatpush.msra.mxu0 0.0
    %129 = vmatpush.msra.mxu0 0.0
    %130 = vmatpush.msra.mxu0 0.0
    %131 = vmatpush.msra.mxu0 0.0
    %132 = vmatpush.msra.mxu0 0.0
    %133 = vmatpush.msra.mxu0 0.0
    %134 = vmatpush.msra.mxu0 0.0
    %135 = vmatpush.msra.mxu0 0.0
    %136 = vmatpush.msra.mxu0 0.0
    %137 = vmatpush.msra.mxu0 0.0
    %138 = vmatpush.msra.mxu0 %v67
    %139 = vmatmul.f32.gmra.mxu0 %v121
    %v140 = vpop.f32.mrf.mxu0
    %v141 = vadd.f32 0.0, %v140
    %142 = vdwg.mxu0
    %v143 = vadd.f32 %v116, %v141
    %v144 = vld [vmem:[%s5] sm:$0xff]
    %v145 = vld [vmem:[%s6] sm:$0xff]
    %146 = vadd.xlane.f32.xlu0 %v143
    %v147 = vpop.xlane.xlu0 %146
    %v148 = vmul.f32 %v143, %v143
    %149 = vadd.xlane.f32.xlu0 %v148
    %v150 = vpop.xlane.xlu0 %149
    %v151 = vmul.f32 %v147, 0.03125
    %v152 = vmul.f32 %v150, 0.03125
    %v153 = vmul.f32 %v151, %v151
    %v154 = vsub.f32 %v152, %v153
    %v155 = vadd.f32 %v154, 1e-05
    %v156 = vrsqrt.pop %v155
    %v157 = vmul.f32 %v156, %v155
    %v158 = vmul.f32 %v157, %v156
    %v159 = vmul.f32 0.5, %v158
    %v160 = vsub.f32 1.5, %v159
    %v161 = vmul.f32 %v156, %v160
    %vm162 = vweird.f32 %v155
    %vm163 = vweird.f32 %v156
    %vm164 = vmor %vm162, %vm163
    %v165 = vsel %vm164, %v156, %v161
    %v166 = vmul.f32 %v144, %v165
    %v167 = vmul.f32 %v151, %v166
    %v168 = vsub.f32 %v145, %v167
    %170 = vset.pattern.permute.xlu0 0
    %171 = vperm.xlu0 %170, %v166
    %v172 = vpop.permute.xlu0 %171
    %v174 = vmul.f32 %v143, %v172
    %176 = vset.pattern.permute.xlu0 0
    %177 = vperm.xlu0 %176, %v168
    %v178 = vpop.permute.xlu0 %177
    %v180 = vadd.f32 %v174, %v178
    %v181 = vmax.f32 %v180, 0.0
    %v183 = vperm.slane %v53, 0
    %v185 = vmul.f32 %v181, %v183
    %186 = vrot.lane.b32.xlu0 %v185, 1
    %v187 = vpop.permute.xlu0 %186
    %v188 = vmul.f32 %v187, %v59
    %189 = vrot.lane.b32.xlu0 %v185, 127
    %v190 = vpop.permute.xlu0 %189
    %v191 = vmul.f32 %v190, %v65
    %s192 = scalar_lea.vmem [#allocation2], 8
    %v193 = vld [vmem:[%s192] sm:$0xff]
    %v194 = vld [vmem:[#allocation2] sm:$0xff]
    %v196 = vsel %vm71, %v194, 0
    %198 = vmatpush.msra.mxu0 0.0
    %199 = vmatpush.msra.mxu0 0.0
    %200 = vmatpush.msra.mxu0 0.0
    %201 = vmatpush.msra.mxu0 0.0
    %202 = vmatpush.msra.mxu0 0.0
    %203 = vmatpush.msra.mxu0 0.0
    %204 = vmatpush.msra.mxu0 0.0
    %205 = vmatpush.msra.mxu0 0.0
    %206 = vmatpush.msra.mxu0 0.0
    %207 = vmatpush.msra.mxu0 0.0
    %208 = vmatpush.msra.mxu0 0.0
    %209 = vmatpush.msra.mxu0 0.0
    %210 = vmatpush.msra.mxu0 0.0
    %211 = vmatpush.msra.mxu0 0.0
    %212 = vmatpush.msra.mxu0 0.0
    %213 = vmatpush.msra.mxu0 %v188
    %214 = vmatmul.f32.gmra.mxu0 %v196
    %v215 = vpop.f32.mrf.mxu0
    %v216 = vadd.f32 0.0, %v215
    %217 = vdwg.mxu0
    %v219 = vsel %vm71, %v193, 0
    %221 = vmatpush.msra.mxu0 0.0
    %222 = vmatpush.msra.mxu0 0.0
    %223 = vmatpush.msra.mxu0 0.0
    %224 = vmatpush.msra.mxu0 0.0
    %225 = vmatpush.msra.mxu0 0.0
    %226 = vmatpush.msra.mxu0 0.0
    %227 = vmatpush.msra.mxu0 0.0
    %228 = vmatpush.msra.mxu0 0.0
    %229 = vmatpush.msra.mxu0 0.0
    %230 = vmatpush.msra.mxu0 0.0
    %231 = vmatpush.msra.mxu0 0.0
    %232 = vmatpush.msra.mxu0 0.0
    %233 = vmatpush.msra.mxu0 0.0
    %234 = vmatpush.msra.mxu0 0.0
    %235 = vmatpush.msra.mxu0 0.0
    %236 = vmatpush.msra.mxu0 %v185
    %237 = vmatmul.f32.gmra.mxu0 %v219
    %v238 = vpop.f32.mrf.mxu0
    %v239 = vadd.f32 %v216, %v238
    %240 = vdwg.mxu0
    %s241 = scalar_lea.vmem [#allocation2], 16
    %v242 = vld [vmem:[%s241] sm:$0xff]
    %v244 = vsel %vm71, %v242, 0
    %246 = vmatpush.msra.mxu0 0.0
    %247 = vmatpush.msra.mxu0 0.0
    %248 = vmatpush.msra.mxu0 0.0
    %249 = vmatpush.msra.mxu0 0.0
    %250 = vmatpush.msra.mxu0 0.0
    %251 = vmatpush.msra.mxu0 0.0
    %252 = vmatpush.msra.mxu0 0.0
    %253 = vmatpush.msra.mxu0 0.0
    %254 = vmatpush.msra.mxu0 0.0
    %255 = vmatpush.msra.mxu0 0.0
    %256 = vmatpush.msra.mxu0 0.0
    %257 = vmatpush.msra.mxu0 0.0
    %258 = vmatpush.msra.mxu0 0.0
    %259 = vmatpush.msra.mxu0 0.0
    %260 = vmatpush.msra.mxu0 0.0
    %261 = vmatpush.msra.mxu0 %v191
    %262 = vmatmul.f32.gmra.mxu0 %v244
    %v263 = vpop.f32.mrf.mxu0
    %v264 = vadd.f32 0.0, %v263
    %265 = vdwg.mxu0
    %v266 = vadd.f32 %v239, %v264
    %v267 = vld [vmem:[%s8] sm:$0xff]
    %v268 = vld [vmem:[%s9] sm:$0xff]
    %269 = vadd.xlane.f32.xlu0 %v266
    %v270 = vpop.xlane.xlu0 %269
    %v271 = vmul.f32 %v266, %v266
    %272 = vadd.xlane.f32.xlu0 %v271
    %v273 = vpop.xlane.xlu0 %272
    %v274 = vmul.f32 %v270, 0.03125
    %v275 = vmul.f32 %v273, 0.03125
    %v276 = vmul.f32 %v274, %v274
    %v277 = vsub.f32 %v275, %v276
    %v278 = vadd.f32 %v277, 1e-05
    %v279 = vrsqrt.pop %v278
    %v280 = vmul.f32 %v279, %v278
    %v281 = vmul.f32 %v280, %v279
    %v282 = vmul.f32 0.5, %v281
    %v283 = vsub.f32 1.5, %v282
    %v284 = vmul.f32 %v279, %v283
    %vm285 = vweird.f32 %v278
    %vm286 = vweird.f32 %v279
    %vm287 = vmor %vm285, %vm286
    %v288 = vsel %vm287, %v279, %v284
    %v289 = vmul.f32 %v267, %v288
    %v290 = vmul.f32 %v274, %v289
    %v291 = vsub.f32 %v268, %v290
    %293 = vset.pattern.permute.xlu0 0
    %294 = vperm.xlu0 %293, %v289
    %v295 = vpop.permute.xlu0 %294
    %v297 = vmul.f32 %v266, %v295
    %299 = vset.pattern.permute.xlu0 0
    %300 = vperm.xlu0 %299, %v291
    %v301 = vpop.permute.xlu0 %300
    %v303 = vadd.f32 %v297, %v301
    %v304 = vadd.f32 %v303, %v55
    %v305 = vmax.f32 %v304, 0.0
    %306 = vst [vmem:[#allocation5] sm:$0xff] %v305
    // Predicated region
    $region46: #{tpu_custom_call.1} parent=1 // pred_check
      _
    $region47: #{tpu_custom_call.1} parent=1 // pred_check_branch
      %308 = sbr.rel (0) target = $region49
    $region48: #{tpu_custom_call.1} parent=1 // pred_region
      %310 = vsyncadd [#allocation4], 0
      %s312 = sshll.u32 [#allocation5], 4
      %s313 = int_to_ptr.vmem [resolvable:$true] %s312
      %s314 = sshll.u32 %s10, 4
      %s315 = int_to_ptr.hbm [resolvable:$true] %s314
      %317 = dma.vmem_to_hbm [thread:$0]  %s313, 128, %s315, [#allocation4]
    $region49: #{tpu_custom_call.1} parent=1 // pred_fallthru
      _
    // Predicated region
    $region50: #{tpu_custom_call.1} parent=1 // pred_check
      _
    $region51: #{tpu_custom_call.1} parent=1 // pred_check_branch
      %319 = sbr.rel (0) target = $region53
    $region52: #{tpu_custom_call.1} parent=1 // pred_region
      %321 = dma.done [#allocation4], 128
    $region53: #{tpu_custom_call.1} parent=1 // pred_fallthru
      _
    %322 = vsyncpa [#allocation3], 1
    %323 = vsyncpa [#allocation4], 1

</llo_original>
